<compile_context>
chip_gen: v7x
topology: tpu7x:2x2x1
jax: 0.10.0
libtpu: 0.0.40
codegen_flags: <defaults>
</compile_context>

<pallas_src>
import functools

import jax
import jax.numpy as jnp
from jax import lax
from jax.experimental import pallas as pl
from jax.experimental.pallas import tpu as pltpu


# ---------------------------------------------------------------------------
# Pallas kernel: one grid step = `gb` graphs.  All matmuls (5 GCN layers worth
# + Z Z^T) and the elementwise activations run on-chip from one packed
# per-graph slab and one packed parameter slab.
# ---------------------------------------------------------------------------
def graphvae_kernel(in_ref, p_ref, out_ref, *,
                    gb, n, fin, hid, lat, maxi, out_w):
    S = in_ref[...]                         # [GB, N, N+Fin+L]  A | X | eps
    A = S[:, :, :n]                         # [GB, N, N]   normalized adjacency
    X = S[:, :, n:n + fin]                  # [GB, N, Fin] node features
    eps = S[:, :, n + fin:n + fin + lat]    # [GB, N, L]   reparam noise
    P = p_ref[...]                          # [4, MAXI+1, MAXO] packed weights+biases

    def gcn(h, k, din, dout):
        # GCNConv: A_norm @ (H @ W) + b.  Weights are shared across the GB
        # graphs, so H @ W contracts only the feature axis (one tall matmul);
        # the A-application is a batched MXU contraction.
        w = P[k, :din, :dout]               # [din, dout]
        b = P[k, maxi, :dout]               # [dout] -> broadcasts over (GB, N)
        hw = jnp.einsum('bnd,de->bne', h, w,
                        preferred_element_type=jnp.float32)
        ah = jnp.einsum('bij,bjd->bid', A, hw,
                        preferred_element_type=jnp.float32)
        return ah + b

    # ---- encode ----
    h1 = jnp.maximum(gcn(X, 0, fin, hid), 0.0)        # relu(conv1)
    ml = gcn(h1, 1, hid, 2 * lat)                     # fused conv_mu | conv_logvar
    mu = ml[:, :, :lat]
    logvar = ml[:, :, lat:]

    # ---- reparameterize (training mode: eps * exp(0.5*logvar) + mu) ----
    # TODO(synk): eval-mode path (z = mu, no noise) would need a mode flag.
    z = eps * jnp.exp(0.5 * logvar) + mu

    # ---- dot-product adjacency decode: sigmoid(Z Z^T), 'nt' contraction ----
    zzT = jnp.einsum('bik,bjk->bij', z, z,
                     preferred_element_type=jnp.float32)
    a_pred = jax.nn.sigmoid(zzT)

    # ---- feature decode ----
    h2 = jnp.maximum(gcn(z, 2, lat, hid), 0.0)        # relu(conv2)
    x_pred = jax.nn.sigmoid(gcn(h2, 3, hid, fin))     # sigmoid(conv3)

    # ---- single lane-dense output slab: mu | logvar | z | x_pred | A_pred | 0 ----
    parts = [mu, logvar, z, x_pred, a_pred]
    pad = out_w - (3 * lat + fin + n)
    if pad:
        parts.append(jnp.zeros((gb, n, pad), jnp.float32))
    out_ref[...] = jnp.concatenate(parts, axis=-1)


# ---------------------------------------------------------------------------
# Plain-JAX glue: graph preprocessing, parameter packing, pallas_call wrapper.
# ---------------------------------------------------------------------------
def gcn_normalized_adjacency(edge_index, num_nodes):
    """A_hat = A + I, then D^{-1/2} A_hat D^{-1/2} (GCNConv default norm)."""
    src, dst = edge_index[0], edge_index[1]
    adj = jnp.zeros((num_nodes, num_nodes), jnp.float32)
    # NOTE: .set() dedupes repeated edges (PyG's scatter-add would count them
    # twice); identical for simple-graph edge lists like the ring below.
    adj = adj.at[dst, src].set(1.0)
    adj = adj.at[src, dst].set(1.0)
    adj = adj + jnp.eye(num_nodes, dtype=jnp.float32)
    deg = jnp.sum(adj, axis=1)
    dinv = jnp.where(deg > 0, 1.0 / jnp.sqrt(deg), 0.0)
    return adj * dinv[:, None] * dinv[None, :]


def init_gcn_params(key, in_dim, out_dim):
    """Glorot-uniform weight [in, out] + zero bias [1, out] (deterministic)."""
    limit = jnp.sqrt(6.0 / (in_dim + out_dim))
    w = jax.random.uniform(key, (in_dim, out_dim), jnp.float32, -limit, limit)
    b = jnp.zeros((1, out_dim), jnp.float32)
    return w, b


def pack_params(params, fin, hid, lat):
    """Pack 5 GCN layers (mu/logvar heads fused) into one [4, MAXI+1, MAXO] slab.

    Slot k: rows [0:in_dim] hold the weight, row MAXI holds the bias.
    """
    (w1, b1), (wmu, bmu), (wlv, blv), (w2, b2), (w3, b3) = params
    wml = jnp.concatenate([wmu, wlv], axis=1)      # [H, 2L]
    bml = jnp.concatenate([bmu, blv], axis=1)      # [1, 2L]
    maxi = max(fin, hid, lat)
    maxo = max(hid, 2 * lat, fin)
    slab = jnp.zeros((4, maxi + 1, maxo), jnp.float32)

    def put(s, k, w, b):
        s = s.at[k, : w.shape[0], : w.shape[1]].set(w)
        s = s.at[k, maxi, : b.shape[1]].set(b[0])
        return s

    slab = put(slab, 0, w1, b1)     # conv1:           Fin -> H
    slab = put(slab, 1, wml, bml)   # conv_mu|logvar:  H   -> 2L
    slab = put(slab, 2, w2, b2)     # conv2:           L   -> H
    slab = put(slab, 3, w3, b3)     # conv3:           H   -> Fin
    return slab


def _round_up(x, m):
    return ((x + m - 1) // m) * m


@functools.partial(jax.jit,
                   static_argnames=("fin", "hid", "lat", "graphs_per_block"))
def graphvae_forward(a_norm, x, eps, param_slab, *, fin, hid, lat,
                     graphs_per_block=None):
    """Batched GraphVAE forward.

    a_norm: [B, N, N], x: [B, N, Fin], eps: [B, N, L], param_slab: packed weights.
    Returns (A_pred, mu, logvar, z, x_pred) each with a leading batch dim.
    """
    B, N, _ = a_norm.shape
    gb = B if graphs_per_block is None else graphs_per_block
    assert B % gb == 0, "graphs_per_block must divide the batch size"
    maxi = param_slab.shape[1] - 1
    maxo = param_slab.shape[2]
    out_w = _round_up(3 * lat + fin + N, 128)       # lane-dense output slab width
    in_w = N + fin + lat

    # one per-graph input slab: A_norm | X | eps  -> a single input DMA/step
    in_slab = jnp.concatenate([a_norm, x, eps], axis=-1)   # [B, N, N+Fin+L]

    kernel = functools.partial(
        graphvae_kernel, gb=gb, n=N, fin=fin, hid=hid, lat=lat,
        maxi=maxi, out_w=out_w)

    out = pl.pallas_call(
        kernel,
        out_shape=jax.ShapeDtypeStruct((B, N, out_w), jnp.float32),
        grid=(B // gb,),
        in_specs=[
            pl.BlockSpec((gb, N, in_w), lambda b: (b, 0, 0)),          # A|X|eps
            pl.BlockSpec((4, maxi + 1, maxo), lambda b: (0, 0, 0)),    # params
        ],
        out_specs=pl.BlockSpec((gb, N, out_w), lambda b: (b, 0, 0)),
        compiler_params=pltpu.CompilerParams(
            dimension_semantics=("parallel",)),   # v7x: graph blocks on both TCs
    )(in_slab, param_slab)

    mu = out[:, :, 0:lat]
    logvar = out[:, :, lat:2 * lat]
    z = out[:, :, 2 * lat:3 * lat]
    x_pred = out[:, :, 3 * lat:3 * lat + fin]
    a_pred = out[:, :, 3 * lat + fin:3 * lat + fin + N]
    return a_pred, mu, logvar, z, x_pred


def graphvae_reference(a_norm, x, params, eps):
    """Pure-JAX reference of the torch GraphVAE.forward (training mode)."""
    (w1, b1), (wmu, bmu), (wlv, blv), (w2, b2), (w3, b3) = params

    def gcn(h, w, b):
        return a_norm @ (h @ w) + b

    h1 = jax.nn.relu(gcn(x, w1, b1))
    mu = gcn(h1, wmu, bmu)
    logvar = gcn(h1, wlv, blv)
    z = eps * jnp.exp(0.5 * logvar) + mu
    a_pred = jax.nn.sigmoid(z @ z.T)
    h2 = jax.nn.relu(gcn(z, w2, b2))
    x_pred = jax.nn.sigmoid(gcn(h2, w3, b3))
    return a_pred, mu, logvar, z, x_pred


if __name__ == "__main__":
    B = 2        # graphs per batch (all processed in one grid step here)
    N = 8        # nodes per graph
    IN_DIM = 16  # node feature dim
    HIDDEN = 32
    LATENT = 8

    key = jax.random.PRNGKey(0)
    kx, keps, k1, k2, k3, k4, k5 = jax.random.split(key, 7)

    x = jax.random.normal(kx, (B, N, IN_DIM), jnp.float32)
    eps = jax.random.normal(keps, (B, N, LATENT), jnp.float32)   # training noise

    # undirected ring graph (same static topology for every batch element)
    src = jnp.concatenate([jnp.arange(N), (jnp.arange(N) + 1) % N])
    dst = jnp.concatenate([(jnp.arange(N) + 1) % N, jnp.arange(N)])
    edge_index = jnp.stack([src, dst]).astype(jnp.int32)         # [2, 2N]

    params = (
        init_gcn_params(k1, IN_DIM, HIDDEN),   # conv1
        init_gcn_params(k2, HIDDEN, LATENT),   # conv_mu
        init_gcn_params(k3, HIDDEN, LATENT),   # conv_logvar
        init_gcn_params(k4, LATENT, HIDDEN),   # conv2
        init_gcn_params(k5, HIDDEN, IN_DIM),   # conv3
    )

    # static-topology preprocessing + parameter packing done ONCE, outside the
    # per-step kernel call.
    a_norm_1 = gcn_normalized_adjacency(edge_index, N)
    a_norm = jnp.stack([a_norm_1] * B)                        # [B, N, N]
    param_slab = pack_params(params, IN_DIM, HIDDEN, LATENT)  # [4, 33, 32]

    A_pred, mu, logvar, z, x_pred = graphvae_forward(
        a_norm, x, eps, param_slab, fin=IN_DIM, hid=HIDDEN, lat=LATENT,
        graphs_per_block=B)
    jax.block_until_ready((A_pred, mu, logvar, z, x_pred))

    # shape / sanity checks
    assert A_pred.shape == (B, N, N)
    assert mu.shape == (B, N, LATENT) and logvar.shape == (B, N, LATENT)
    assert z.shape == (B, N, LATENT) and x_pred.shape == (B, N, IN_DIM)
    assert bool(jnp.all(jnp.isfinite(A_pred))) and bool(jnp.all(jnp.isfinite(x_pred)))

    # correctness vs. a plain-JAX reference of the torch forward, per graph
    for b in range(B):
        ra, rm, rl, rz, rx = graphvae_reference(a_norm_1, x[b], params, eps[b])
        for got, ref in ((A_pred[b], ra), (mu[b], rm), (logvar[b], rl),
                         (z[b], rz), (x_pred[b], rx)):
            assert jnp.allclose(got, ref, atol=2e-3, rtol=2e-3), "mismatch vs reference"

    print("KERNEL_OK")
</pallas_src>

<mosaic_0001>
module attributes {stable_mosaic.version = 11 : i64} {
  func.func @graphvae_kernel(%arg0: i32, %arg1: memref<2x8x32xf32, #tpu.memory_space<vmem>>, %arg2: memref<4x33x32xf32, #tpu.memory_space<vmem>>, %arg3: memref<2x8x128xf32, #tpu.memory_space<vmem>>) attributes {dimension_semantics = [#tpu.dimension_semantics<parallel>], iteration_bounds = array<i64: 1>, scalar_prefetch = 0 : i64, scratch_operands = 0 : i64, tpu.core_type = #tpu.core_type<tc>, window_params = [{transform_indices = @transform_0, window_bounds = array<i64: 2, 8, 32>}, {pipeline_mode = #tpu.pipeline_mode<synchronous>, transform_indices = @transform_1, window_bounds = array<i64: 4, 33, 32>}, {transform_indices = @transform_2, window_bounds = array<i64: 2, 8, 128>}]} {
    %c0 = arith.constant 0 : index
    %c0_0 = arith.constant 0 : index
    %c0_1 = arith.constant 0 : index
    %0 = vector.load %arg1[%c0, %c0_0, %c0_1] : memref<2x8x32xf32, #tpu.memory_space<vmem>>, vector<2x8x32xf32>
    %1 = vector.extract_strided_slice %0 {offsets = [0, 0, 0], sizes = [2, 8, 8], strides = [1, 1, 1]} : vector<2x8x32xf32> to vector<2x8x8xf32>
    %2 = vector.extract_strided_slice %0 {offsets = [0, 0, 8], sizes = [2, 8, 16], strides = [1, 1, 1]} : vector<2x8x32xf32> to vector<2x8x16xf32>
    %3 = vector.extract_strided_slice %0 {offsets = [0, 0, 24], sizes = [2, 8, 8], strides = [1, 1, 1]} : vector<2x8x32xf32> to vector<2x8x8xf32>
    %c0_2 = arith.constant 0 : index
    %c0_3 = arith.constant 0 : index
    %c0_4 = arith.constant 0 : index
    %4 = vector.load %arg2[%c0_2, %c0_3, %c0_4] : memref<4x33x32xf32, #tpu.memory_space<vmem>>, vector<4x33x32xf32>
    %5 = vector.extract_strided_slice %4 {offsets = [0, 0, 0], sizes = [1, 16, 32], strides = [1, 1, 1]} : vector<4x33x32xf32> to vector<1x16x32xf32>
    %6 = vector.shape_cast %5 : vector<1x16x32xf32> to vector<16x32xf32>
    %7 = vector.extract_strided_slice %4 {offsets = [0, 32, 0], sizes = [1, 1, 32], strides = [1, 1, 1]} : vector<4x33x32xf32> to vector<1x1x32xf32>
    %8 = vector.shape_cast %7 : vector<1x1x32xf32> to vector<32xf32>
    "tpu.trace_start"() <{level = 10 : i32, message = "bnd,de->bne"}> : () -> ()
    %cst = arith.constant dense<0.000000e+00> : vector<2x8x32xf32>
    %9 = tpu.matmul %2, %6, %cst {dimension_numbers = #tpu.dot_dimension_numbers<[2], [0], [0, 1], [1], [0, 0, 0, 1, 1, 1], [], []>} : vector<2x8x16xf32>, vector<16x32xf32>, vector<2x8x32xf32> -> vector<2x8x32xf32>
    "tpu.trace_stop"() : () -> ()
    "tpu.trace_start"() <{level = 10 : i32, message = "bij,bjd->bid"}> : () -> ()
    %cst_5 = arith.constant dense<0.000000e+00> : vector<2x8x32xf32>
    %10 = tpu.matmul %1, %9, %cst_5 {dimension_numbers = #tpu.dot_dimension_numbers<[2], [1], [1], [2], [0, 0, 0, 1, 1, 2], [0], [0]>} : vector<2x8x8xf32>, vector<2x8x32xf32>, vector<2x8x32xf32> -> vector<2x8x32xf32>
    "tpu.trace_stop"() : () -> ()
    %11 = vector.shape_cast %8 : vector<32xf32> to vector<1x1x32xf32>
    %12 = vector.broadcast %11 : vector<1x1x32xf32> to vector<2x8x32xf32>
    %13 = arith.addf %10, %12 : vector<2x8x32xf32>
    %cst_6 = arith.constant 0.000000e+00 : f32
    %14 = vector.broadcast %cst_6 : f32 to vector<2x8x32xf32>
    %15 = arith.maximumf %13, %14 : vector<2x8x32xf32>
    %16 = vector.extract_strided_slice %4 {offsets = [1, 0, 0], sizes = [1, 32, 16], strides = [1, 1, 1]} : vector<4x33x32xf32> to vector<1x32x16xf32>
    %17 = vector.shape_cast %16 : vector<1x32x16xf32> to vector<32x16xf32>
    %18 = vector.extract_strided_slice %4 {offsets = [1, 32, 0], sizes = [1, 1, 16], strides = [1, 1, 1]} : vector<4x33x32xf32> to vector<1x1x16xf32>
    %19 = vector.shape_cast %18 : vector<1x1x16xf32> to vector<16xf32>
    "tpu.trace_start"() <{level = 10 : i32, message = "bnd,de->bne"}> : () -> ()
    %cst_7 = arith.constant dense<0.000000e+00> : vector<2x8x16xf32>
    %20 = tpu.matmul %15, %17, %cst_7 {dimension_numbers = #tpu.dot_dimension_numbers<[2], [0], [0, 1], [1], [0, 0, 0, 1, 1, 1], [], []>} : vector<2x8x32xf32>, vector<32x16xf32>, vector<2x8x16xf32> -> vector<2x8x16xf32>
    "tpu.trace_stop"() : () -> ()
    "tpu.trace_start"() <{level = 10 : i32, message = "bij,bjd->bid"}> : () -> ()
    %cst_8 = arith.constant dense<0.000000e+00> : vector<2x8x16xf32>
    %21 = tpu.matmul %1, %20, %cst_8 {dimension_numbers = #tpu.dot_dimension_numbers<[2], [1], [1], [2], [0, 0, 0, 1, 1, 2], [0], [0]>} : vector<2x8x8xf32>, vector<2x8x16xf32>, vector<2x8x16xf32> -> vector<2x8x16xf32>
    "tpu.trace_stop"() : () -> ()
    %22 = vector.shape_cast %19 : vector<16xf32> to vector<1x1x16xf32>
    %23 = vector.broadcast %22 : vector<1x1x16xf32> to vector<2x8x16xf32>
    %24 = arith.addf %21, %23 : vector<2x8x16xf32>
    %25 = vector.extract_strided_slice %24 {offsets = [0, 0, 0], sizes = [2, 8, 8], strides = [1, 1, 1]} : vector<2x8x16xf32> to vector<2x8x8xf32>
    %26 = vector.extract_strided_slice %24 {offsets = [0, 0, 8], sizes = [2, 8, 8], strides = [1, 1, 1]} : vector<2x8x16xf32> to vector<2x8x8xf32>
    %cst_9 = arith.constant 5.000000e-01 : f32
    %27 = vector.broadcast %cst_9 : f32 to vector<2x8x8xf32>
    %28 = arith.mulf %27, %26 : vector<2x8x8xf32>
    %29 = math.exp %28 : vector<2x8x8xf32>
    %30 = arith.mulf %3, %29 : vector<2x8x8xf32>
    %31 = arith.addf %30, %25 : vector<2x8x8xf32>
    "tpu.trace_start"() <{level = 10 : i32, message = "bik,bjk->bij"}> : () -> ()
    %cst_10 = arith.constant dense<0.000000e+00> : vector<2x8x8xf32>
    %32 = tpu.matmul %31, %31, %cst_10 {dimension_numbers = #tpu.dot_dimension_numbers<[2], [2], [1], [1], [0, 0, 0, 1, 1, 1], [0], [0]>} : vector<2x8x8xf32>, vector<2x8x8xf32>, vector<2x8x8xf32> -> vector<2x8x8xf32>
    "tpu.trace_stop"() : () -> ()
    %33 = arith.negf %32 : vector<2x8x8xf32>
    %34 = math.exp %33 : vector<2x8x8xf32>
    %cst_11 = arith.constant 1.000000e+00 : f32
    %35 = vector.broadcast %cst_11 : f32 to vector<2x8x8xf32>
    %36 = arith.addf %35, %34 : vector<2x8x8xf32>
    %37 = arith.divf %35, %36 : vector<2x8x8xf32>
    %38 = vector.extract_strided_slice %4 {offsets = [2, 0, 0], sizes = [1, 8, 32], strides = [1, 1, 1]} : vector<4x33x32xf32> to vector<1x8x32xf32>
    %39 = vector.shape_cast %38 : vector<1x8x32xf32> to vector<8x32xf32>
    %40 = vector.extract_strided_slice %4 {offsets = [2, 32, 0], sizes = [1, 1, 32], strides = [1, 1, 1]} : vector<4x33x32xf32> to vector<1x1x32xf32>
    %41 = vector.shape_cast %40 : vector<1x1x32xf32> to vector<32xf32>
    "tpu.trace_start"() <{level = 10 : i32, message = "bnd,de->bne"}> : () -> ()
    %cst_12 = arith.constant dense<0.000000e+00> : vector<2x8x32xf32>
    %42 = tpu.matmul %31, %39, %cst_12 {dimension_numbers = #tpu.dot_dimension_numbers<[2], [0], [0, 1], [1], [0, 0, 0, 1, 1, 1], [], []>} : vector<2x8x8xf32>, vector<8x32xf32>, vector<2x8x32xf32> -> vector<2x8x32xf32>
    "tpu.trace_stop"() : () -> ()
    "tpu.trace_start"() <{level = 10 : i32, message = "bij,bjd->bid"}> : () -> ()
    %cst_13 = arith.constant dense<0.000000e+00> : vector<2x8x32xf32>
    %43 = tpu.matmul %1, %42, %cst_13 {dimension_numbers = #tpu.dot_dimension_numbers<[2], [1], [1], [2], [0, 0, 0, 1, 1, 2], [0], [0]>} : vector<2x8x8xf32>, vector<2x8x32xf32>, vector<2x8x32xf32> -> vector<2x8x32xf32>
    "tpu.trace_stop"() : () -> ()
    %44 = vector.shape_cast %41 : vector<32xf32> to vector<1x1x32xf32>
    %45 = vector.broadcast %44 : vector<1x1x32xf32> to vector<2x8x32xf32>
    %46 = arith.addf %43, %45 : vector<2x8x32xf32>
    %cst_14 = arith.constant 0.000000e+00 : f32
    %47 = vector.broadcast %cst_14 : f32 to vector<2x8x32xf32>
    %48 = arith.maximumf %46, %47 : vector<2x8x32xf32>
    %49 = vector.extract_strided_slice %4 {offsets = [3, 0, 0], sizes = [1, 32, 16], strides = [1, 1, 1]} : vector<4x33x32xf32> to vector<1x32x16xf32>
    %50 = vector.shape_cast %49 : vector<1x32x16xf32> to vector<32x16xf32>
    %51 = vector.extract_strided_slice %4 {offsets = [3, 32, 0], sizes = [1, 1, 16], strides = [1, 1, 1]} : vector<4x33x32xf32> to vector<1x1x16xf32>
    %52 = vector.shape_cast %51 : vector<1x1x16xf32> to vector<16xf32>
    "tpu.trace_start"() <{level = 10 : i32, message = "bnd,de->bne"}> : () -> ()
    %cst_15 = arith.constant dense<0.000000e+00> : vector<2x8x16xf32>
    %53 = tpu.matmul %48, %50, %cst_15 {dimension_numbers = #tpu.dot_dimension_numbers<[2], [0], [0, 1], [1], [0, 0, 0, 1, 1, 1], [], []>} : vector<2x8x32xf32>, vector<32x16xf32>, vector<2x8x16xf32> -> vector<2x8x16xf32>
    "tpu.trace_stop"() : () -> ()
    "tpu.trace_start"() <{level = 10 : i32, message = "bij,bjd->bid"}> : () -> ()
    %cst_16 = arith.constant dense<0.000000e+00> : vector<2x8x16xf32>
    %54 = tpu.matmul %1, %53, %cst_16 {dimension_numbers = #tpu.dot_dimension_numbers<[2], [1], [1], [2], [0, 0, 0, 1, 1, 2], [0], [0]>} : vector<2x8x8xf32>, vector<2x8x16xf32>, vector<2x8x16xf32> -> vector<2x8x16xf32>
    "tpu.trace_stop"() : () -> ()
    %55 = vector.shape_cast %52 : vector<16xf32> to vector<1x1x16xf32>
    %56 = vector.broadcast %55 : vector<1x1x16xf32> to vector<2x8x16xf32>
    %57 = arith.addf %54, %56 : vector<2x8x16xf32>
    %58 = arith.negf %57 : vector<2x8x16xf32>
    %59 = math.exp %58 : vector<2x8x16xf32>
    %cst_17 = arith.constant 1.000000e+00 : f32
    %60 = vector.broadcast %cst_17 : f32 to vector<2x8x16xf32>
    %61 = arith.addf %60, %59 : vector<2x8x16xf32>
    %62 = arith.divf %60, %61 : vector<2x8x16xf32>
    %cst_18 = arith.constant 0.000000e+00 : f32
    %63 = vector.broadcast %cst_18 : f32 to vector<2x8x80xf32>
    %64 = tpu.concatenate %25, %26, %31, %62, %37, %63 in 2 : vector<2x8x8xf32>, vector<2x8x8xf32>, vector<2x8x8xf32>, vector<2x8x16xf32>, vector<2x8x8xf32>, vector<2x8x80xf32> -> vector<2x8x128xf32>
    %c0_19 = arith.constant 0 : index
    %c0_20 = arith.constant 0 : index
    %c0_21 = arith.constant 0 : index
    %65 = vector.load %arg3[%c0_19, %c0_20, %c0_21] : memref<2x8x128xf32, #tpu.memory_space<vmem>>, vector<2x8x128xf32>
    tpu.vector_store %arg3[%c0_19, %c0_20, %c0_21], %64 {strides = array<i32>} : memref<2x8x128xf32, #tpu.memory_space<vmem>>, vector<2x8x128xf32>,
    return
  }
  func.func @transform_0(%arg0: i32) -> (i32, i32, i32) {
    %c0_i32 = arith.constant 0 : i32
    %c0_i32_0 = arith.constant 0 : i32
    %c0_i32_1 = arith.constant 0 : i32
    return %arg0, %c0_i32, %c0_i32_0 : i32, i32, i32
  }
  func.func @transform_1(%arg0: i32) -> (i32, i32, i32) {
    %c0_i32 = arith.constant 0 : i32
    %c0_i32_0 = arith.constant 0 : i32
    %c0_i32_1 = arith.constant 0 : i32
    %c0_i32_2 = arith.constant 0 : i32
    return %c0_i32, %c0_i32_0, %c0_i32_1 : i32, i32, i32
  }
  func.func @transform_2(%arg0: i32) -> (i32, i32, i32) {
    %c0_i32 = arith.constant 0 : i32
    %c0_i32_0 = arith.constant 0 : i32
    %c0_i32_1 = arith.constant 0 : i32
    return %arg0, %c0_i32, %c0_i32_0 : i32, i32, i32
  }
}

</mosaic_0001>

<llo_original>
// kernel: graphvae_forward.1
$region0: #{graphvae_forward.1}
  #allocation0 [shape = 'u32[]', space=smem, size = 0x4, offset = 0x4, fixed_abs, tag = 'smem constant byte address 0x4 - core index']
  #allocation1 [shape = 'u32[144,128]{1,0:T(1,128)}', space=vmem, size = 0x12000, scoped, tag = 'internal scratch']
  %s0 = inlined_call_operand.vmem [shape: f32[2,8,32], index: 0, kind: input, shape index: {}]
  %s1 = inlined_call_operand.vmem [shape: f32[4,33,32], index: 1, kind: input, shape index: {}]
  %s2 = inlined_call_operand.vmem [shape: f32[2,8,128], index: 2, kind: output, shape index: {}]
  %s3 = sld [smem:[#allocation0]]
  $region18: #{graphvae_forward.1} parent=0
    _
  %s5 = ssub.s32 1, %s3
  %s6 = scalar_select 0, %s5, %s3
  // Predicated region
  $region2: #{graphvae_forward.1} parent=0 // pred_check
    _
  $region3: #{graphvae_forward.1} parent=0 // pred_check_branch
    %8 = sbr.rel (0) target = $region5
  $region4: #{graphvae_forward.1} parent=0 // pred_region
    _
  $region5: #{graphvae_forward.1} parent=0 // pred_fallthru
    _
  // Predicated region
  $region6: #{graphvae_forward.1} parent=0 // pred_check
    _
  $region7: #{graphvae_forward.1} parent=0 // pred_check_branch
    %10 = sbr.rel (0) target = $region9
  $region8: #{graphvae_forward.1} parent=0 // pred_region
    _
  $region9: #{graphvae_forward.1} parent=0 // pred_fallthru
    _
  %v11 = vld [vmem:[%s0] sm:$0xff]
  %v12 = vld [vmem:[%s0 + $0x8] sm:$0xff]
  %v13 = vld [vmem:[%s1] sm:$0xff]
  %v14 = vld [vmem:[%s1 + $0x8] sm:$0xff]
  %v15 = vld [vmem:[%s1 + $0x20] sm:$0x1]
  %v16 = vld [vmem:[%s1 + $0x28] sm:$0xff]
  %v17 = vld [vmem:[%s1 + $0x30] sm:$0xff]
  %v18 = vld [vmem:[%s1 + $0x38] sm:$0xff]
  %v19 = vld [vmem:[%s1 + $0x40] sm:$0xff]
  %v20 = vld [vmem:[%s1 + $0x48] sm:$0x1]
  %v21 = vld [vmem:[%s1 + $0x50] sm:$0xff]
  %v22 = vld [vmem:[%s1 + $0x70] sm:$0x1]
  %v23 = vld [vmem:[%s1 + $0x78] sm:$0xff]
  %v24 = vld [vmem:[%s1 + $0x80] sm:$0xff]
  %v25 = vld [vmem:[%s1 + $0x88] sm:$0xff]
  %v26 = vld [vmem:[%s1 + $0x90] sm:$0xff]
  %v27 = vld [vmem:[%s1 + $0x98] sm:$0x1]
  %30 = vrot.lane.b32.xlu0 %v11, 120
  %v31 = vpop.permute.xlu0 %30
  %32 = vrot.lane.b32.xlu0 %v12, 120
  %v33 = vpop.permute.xlu0 %32
  %vm34 = vcmask 130048
  %v35 = vsel %vm34, %v31, 0
  %v37 = vsel %vm34, %v33, 0
  %39 = vmatprep.subr.mxu0 0.0
  %40 = vmatpush1.msra.mxu0 %v13
  %41 = vmatprep.subr.mxu0 0.0
  %42 = vmatpush1.msra.mxu0 %v14
  %43 = vmatprep.subr.mxu0 0.0
  %44 = vmatpush1.msra.mxu0 0.0
  %45 = vmatprep.subr.mxu0 0.0
  %46 = vmatpush1.msra.mxu0 0.0
  %47 = vmatprep.subr.mxu0 0.0
  %48 = vmatpush1.msra.mxu0 0.0
  %49 = vmatprep.subr.mxu0 0.0
  %50 = vmatpush1.msra.mxu0 0.0
  %51 = vmatprep.subr.mxu0 0.0
  %52 = vmatpush1.msra.mxu0 0.0
  %53 = vmatprep.subr.mxu0 0.0
  %54 = vmatpush1.msra.mxu0 0.0
  %55 = vmatprep.subr.mxu0 0.0
  %56 = vmatpush1.msra.mxu0 0.0
  %57 = vmatprep.subr.mxu0 0.0
  %58 = vmatpush1.msra.mxu0 0.0
  %59 = vmatprep.subr.mxu0 0.0
  %60 = vmatpush1.msra.mxu0 0.0
  %61 = vmatprep.subr.mxu0 0.0
  %62 = vmatpush1.msra.mxu0 0.0
  %63 = vmatprep.subr.mxu0 0.0
  %64 = vmatpush1.msra.mxu0 0.0
  %65 = vmatprep.subr.mxu0 0.0
  %66 = vmatpush1.msra.mxu0 0.0
  %67 = vmatprep.subr.mxu0 0.0
  %68 = vmatpush1.msra.mxu0 0.0
  %69 = vmatprep.subr.mxu0 0.0
  %70 = vmatpush1.msra.mxu0 0.0
  %71 = vmatprep.subr.mxu0 0.0
  %72 = vmatpush1.msra.mxu0 0.0
  %73 = vmatprep.subr.mxu0 0.0
  %74 = vmatpush1.msra.mxu0 0.0
  %75 = vmatprep.subr.mxu0 0.0
  %76 = vmatpush1.msra.mxu0 0.0
  %77 = vmatprep.subr.mxu0 0.0
  %78 = vmatpush1.msra.mxu0 0.0
  %79 = vmatprep.subr.mxu0 0.0
  %80 = vmatpush1.msra.mxu0 0.0
  %81 = vmatprep.subr.mxu0 0.0
  %82 = vmatpush1.msra.mxu0 0.0
  %83 = vmatprep.subr.mxu0 0.0
  %84 = vmatpush1.msra.mxu0 0.0
  %85 = vmatprep.subr.mxu0 0.0
  %86 = vmatpush1.msra.mxu0 0.0
  %87 = vmatprep.subr.mxu0 0.0
  %88 = vmatpush1.msra.mxu0 0.0
  %89 = vmatprep.subr.mxu0 0.0
  %90 = vmatpush1.msra.mxu0 0.0
  %91 = vmatprep.subr.mxu0 0.0
  %92 = vmatpush1.msra.mxu0 0.0
  %93 = vmatprep.subr.mxu0 0.0
  %94 = vmatpush1.msra.mxu0 0.0
  %95 = vmatprep.subr.mxu0 0.0
  %96 = vmatpush1.msra.mxu0 0.0
  %97 = vmatprep.subr.mxu0 0.0
  %98 = vmatpush1.msra.mxu0 0.0
  %99 = vmatprep.subr.mxu0 0.0
  %100 = vmatpush1.msra.mxu0 0.0
  %101 = vmatprep.subr.mxu0 0.0
  %102 = vmatpush1.msra.mxu0 0.0
  %103 = vmatprep.mubr.f32.mxu0 0.0
  %104 = vmatmul.mubr.f32.gmra.mrb[0].mxu0 %v35
  %v105 = vpop.f32.mrb[0].mxu0
  %v106 = vadd.f32 0.0, %v105
  %v107 = vpop.f32.mrb[0].mxu0
  %108 = vmatprep.mubr.f32.mxu0 0.0
  %109 = vmatmul.mubr.f32.gmra.mrb[0].mxu0 %v37
  %v110 = vpop.f32.mrb[0].mxu0
  %v111 = vadd.f32 0.0, %v110
  %v112 = vpop.f32.mrb[0].mxu0
  %113 = vdwg.mxu0
  %v114 = vlaneseq
  %v115 = vshrl.u32 %v114, 7
  %v116 = vsub.s32 0, %v115
  %v117 = vrot.slane %v15, %v116
  %vm118 = vcmask 64512
  %v119 = vsel %vm118, %v11, 0
  %121 = vmatprep.subr.mxu0 0.0
  %122 = vmatpush1.msra.mxu0 %v106
  %123 = vmatprep.subr.mxu0 0.0
  %124 = vmatpush1.msra.mxu0 0.0
  %125 = vmatprep.subr.mxu0 0.0
  %126 = vmatpush1.msra.mxu0 0.0
  %127 = vmatprep.subr.mxu0 0.0
  %128 = vmatpush1.msra.mxu0 0.0
  %129 = vmatprep.subr.mxu0 0.0
  %130 = vmatpush1.msra.mxu0 0.0
  %131 = vmatprep.subr.mxu0 0.0
  %132 = vmatpush1.msra.mxu0 0.0
  %133 = vmatprep.subr.mxu0 0.0
  %134 = vmatpush1.msra.mxu0 0.0
  %135 = vmatprep.subr.mxu0 0.0
  %136 = vmatpush1.msra.mxu0 0.0
  %137 = vmatprep.subr.mxu0 0.0
  %138 = vmatpush1.msra.mxu0 0.0
  %139 = vmatprep.subr.mxu0 0.0
  %140 = vmatpush1.msra.mxu0 0.0
  %141 = vmatprep.subr.mxu0 0.0
  %142 = vmatpush1.msra.mxu0 0.0
  %143 = vmatprep.subr.mxu0 0.0
  %144 = vmatpush1.msra.mxu0 0.0
  %145 = vmatprep.subr.mxu0 0.0
  %146 = vmatpush1.msra.mxu0 0.0
  %147 = vmatprep.subr.mxu0 0.0
  %148 = vmatpush1.msra.mxu0 0.0
  %149 = vmatprep.subr.mxu0 0.0
  %150 = vmatpush1.msra.mxu0 0.0
  %151 = vmatprep.subr.mxu0 0.0
  %152 = vmatpush1.msra.mxu0 0.0
  %153 = vmatprep.subr.mxu0 0.0
  %154 = vmatpush1.msra.mxu0 0.0
  %155 = vmatprep.subr.mxu0 0.0
  %156 = vmatpush1.msra.mxu0 0.0
  %157 = vmatprep.subr.mxu0 0.0
  %158 = vmatpush1.msra.mxu0 0.0
  %159 = vmatprep.subr.mxu0 0.0
  %160 = vmatpush1.msra.mxu0 0.0
  %161 = vmatprep.subr.mxu0 0.0
  %162 = vmatpush1.msra.mxu0 0.0
  %163 = vmatprep.subr.mxu0 0.0
  %164 = vmatpush1.msra.mxu0 0.0
  %165 = vmatprep.subr.mxu0 0.0
  %166 = vmatpush1.msra.mxu0 0.0
  %167 = vmatprep.subr.mxu0 0.0
  %168 = vmatpush1.msra.mxu0 0.0
  %169 = vmatprep.subr.mxu0 0.0
  %170 = vmatpush1.msra.mxu0 0.0
  %171 = vmatprep.subr.mxu0 0.0
  %172 = vmatpush1.msra.mxu0 0.0
  %173 = vmatprep.subr.mxu0 0.0
  %174 = vmatpush1.msra.mxu0 0.0
  %175 = vmatprep.subr.mxu0 0.0
  %176 = vmatpush1.msra.mxu0 0.0
  %177 = vmatprep.subr.mxu0 0.0
  %178 = vmatpush1.msra.mxu0 0.0
  %179 = vmatprep.subr.mxu0 0.0
  %180 = vmatpush1.msra.mxu0 0.0
  %181 = vmatprep.subr.mxu0 0.0
  %182 = vmatpush1.msra.mxu0 0.0
  %183 = vmatprep.subr.mxu0 0.0
  %184 = vmatpush1.msra.mxu0 0.0
  %185 = vmatprep.mubr.f32.mxu0 0.0
  %186 = vmatmul.mubr.f32.gmra.mrb[0].mxu0 %v119
  %v187 = vpop.f32.mrb[0].mxu0
  %v188 = vadd.f32 %v117, %v187
  %v189 = vpop.f32.mrb[0].mxu0
  %190 = vdwg.mxu0
  %v191 = vsel %vm118, %v12, 0
  %193 = vmatprep.subr.mxu0 0.0
  %194 = vmatpush1.msra.mxu0 %v111
  %195 = vmatprep.subr.mxu0 0.0
  %196 = vmatpush1.msra.mxu0 0.0
  %197 = vmatprep.subr.mxu0 0.0
  %198 = vmatpush1.msra.mxu0 0.0
  %199 = vmatprep.subr.mxu0 0.0
  %200 = vmatpush1.msra.mxu0 0.0
  %201 = vmatprep.subr.mxu0 0.0
  %202 = vmatpush1.msra.mxu0 0.0
  %203 = vmatprep.subr.mxu0 0.0
  %204 = vmatpush1.msra.mxu0 0.0
  %205 = vmatprep.subr.mxu0 0.0
  %206 = vmatpush1.msra.mxu0 0.0
  %207 = vmatprep.subr.mxu0 0.0
  %208 = vmatpush1.msra.mxu0 0.0
  %209 = vmatprep.subr.mxu0 0.0
  %210 = vmatpush1.msra.mxu0 0.0
  %211 = vmatprep.subr.mxu0 0.0
  %212 = vmatpush1.msra.mxu0 0.0
  %213 = vmatprep.subr.mxu0 0.0
  %214 = vmatpush1.msra.mxu0 0.0
  %215 = vmatprep.subr.mxu0 0.0
  %216 = vmatpush1.msra.mxu0 0.0
  %217 = vmatprep.subr.mxu0 0.0
  %218 = vmatpush1.msra.mxu0 0.0
  %219 = vmatprep.subr.mxu0 0.0
  %220 = vmatpush1.msra.mxu0 0.0
  %221 = vmatprep.subr.mxu0 0.0
  %222 = vmatpush1.msra.mxu0 0.0
  %223 = vmatprep.subr.mxu0 0.0
  %224 = vmatpush1.msra.mxu0 0.0
  %225 = vmatprep.subr.mxu0 0.0
  %226 = vmatpush1.msra.mxu0 0.0
  %227 = vmatprep.subr.mxu0 0.0
  %228 = vmatpush1.msra.mxu0 0.0
  %229 = vmatprep.subr.mxu0 0.0
  %230 = vmatpush1.msra.mxu0 0.0
  %231 = vmatprep.subr.mxu0 0.0
  %232 = vmatpush1.msra.mxu0 0.0
  %233 = vmatprep.subr.mxu0 0.0
  %234 = vmatpush1.msra.mxu0 0.0
  %235 = vmatprep.subr.mxu0 0.0
  %236 = vmatpush1.msra.mxu0 0.0
  %237 = vmatprep.subr.mxu0 0.0
  %238 = vmatpush1.msra.mxu0 0.0
  %239 = vmatprep.subr.mxu0 0.0
  %240 = vmatpush1.msra.mxu0 0.0
  %241 = vmatprep.subr.mxu0 0.0
  %242 = vmatpush1.msra.mxu0 0.0
  %243 = vmatprep.subr.mxu0 0.0
  %244 = vmatpush1.msra.mxu0 0.0
  %245 = vmatprep.subr.mxu0 0.0
  %246 = vmatpush1.msra.mxu0 0.0
  %247 = vmatprep.subr.mxu0 0.0
  %248 = vmatpush1.msra.mxu0 0.0
  %249 = vmatprep.subr.mxu0 0.0
  %250 = vmatpush1.msra.mxu0 0.0
  %251 = vmatprep.subr.mxu0 0.0
  %252 = vmatpush1.msra.mxu0 0.0
  %253 = vmatprep.subr.mxu0 0.0
  %254 = vmatpush1.msra.mxu0 0.0
  %255 = vmatprep.subr.mxu0 0.0
  %256 = vmatpush1.msra.mxu0 0.0
  %257 = vmatprep.mubr.f32.mxu0 0.0
  %258 = vmatmul.mubr.f32.gmra.mrb[0].mxu0 %v191
  %v259 = vpop.f32.mrb[0].mxu0
  %v260 = vadd.f32 %v117, %v259
  %v261 = vpop.f32.mrb[0].mxu0
  %262 = vdwg.mxu0
  %v263 = vmax.f32 %v188, 0.0
  %v264 = vmax.f32 %v260, 0.0
  %vm265 = vcmask 261120
  %v267 = vsel %vm265, %v263, 0
  %v270 = vsel %vm265, %v264, 0
  %272 = vmatprep.subr.mxu0 0.0
  %273 = vmatpush1.msra.mxu0 %v16
  %274 = vmatprep.subr.mxu0 0.0
  %275 = vmatpush1.msra.mxu0 %v17
  %276 = vmatprep.subr.mxu0 0.0
  %277 = vmatpush1.msra.mxu0 %v18
  %278 = vmatprep.subr.mxu0 0.0
  %279 = vmatpush1.msra.mxu0 %v19
  %280 = vmatprep.subr.mxu0 0.0
  %281 = vmatpush1.msra.mxu0 0.0
  %282 = vmatprep.subr.mxu0 0.0
  %283 = vmatpush1.msra.mxu0 0.0
  %284 = vmatprep.subr.mxu0 0.0
  %285 = vmatpush1.msra.mxu0 0.0
  %286 = vmatprep.subr.mxu0 0.0
  %287 = vmatpush1.msra.mxu0 0.0
  %288 = vmatprep.subr.mxu0 0.0
  %289 = vmatpush1.msra.mxu0 0.0
  %290 = vmatprep.subr.mxu0 0.0
  %291 = vmatpush1.msra.mxu0 0.0
  %292 = vmatprep.subr.mxu0 0.0
  %293 = vmatpush1.msra.mxu0 0.0
  %294 = vmatprep.subr.mxu0 0.0
  %295 = vmatpush1.msra.mxu0 0.0
  %296 = vmatprep.subr.mxu0 0.0
  %297 = vmatpush1.msra.mxu0 0.0
  %298 = vmatprep.subr.mxu0 0.0
  %299 = vmatpush1.msra.mxu0 0.0
  %300 = vmatprep.subr.mxu0 0.0
  %301 = vmatpush1.msra.mxu0 0.0
  %302 = vmatprep.subr.mxu0 0.0
  %303 = vmatpush1.msra.mxu0 0.0
  %304 = vmatprep.subr.mxu0 0.0
  %305 = vmatpush1.msra.mxu0 0.0
  %306 = vmatprep.subr.mxu0 0.0
  %307 = vmatpush1.msra.mxu0 0.0
  %308 = vmatprep.subr.mxu0 0.0
  %309 = vmatpush1.msra.mxu0 0.0
  %310 = vmatprep.subr.mxu0 0.0
  %311 = vmatpush1.msra.mxu0 0.0
  %312 = vmatprep.subr.mxu0 0.0
  %313 = vmatpush1.msra.mxu0 0.0
  %314 = vmatprep.subr.mxu0 0.0
  %315 = vmatpush1.msra.mxu0 0.0
  %316 = vmatprep.subr.mxu0 0.0
  %317 = vmatpush1.msra.mxu0 0.0
  %318 = vmatprep.subr.mxu0 0.0
  %319 = vmatpush1.msra.mxu0 0.0
  %320 = vmatprep.subr.mxu0 0.0
  %321 = vmatpush1.msra.mxu0 0.0
  %322 = vmatprep.subr.mxu0 0.0
  %323 = vmatpush1.msra.mxu0 0.0
  %324 = vmatprep.subr.mxu0 0.0
  %325 = vmatpush1.msra.mxu0 0.0
  %326 = vmatprep.subr.mxu0 0.0
  %327 = vmatpush1.msra.mxu0 0.0
  %328 = vmatprep.subr.mxu0 0.0
  %329 = vmatpush1.msra.mxu0 0.0
  %330 = vmatprep.subr.mxu0 0.0
  %331 = vmatpush1.msra.mxu0 0.0
  %332 = vmatprep.subr.mxu0 0.0
  %333 = vmatpush1.msra.mxu0 0.0
  %334 = vmatprep.subr.mxu0 0.0
  %335 = vmatpush1.msra.mxu0 0.0
  %336 = vmatprep.mubr.f32.mxu0 0.0
  %337 = vmatmul.mubr.f32.gmra.mrb[0].mxu0 %v267
  %v338 = vpop.f32.mrb[0].mxu0
  %v339 = vadd.f32 0.0, %v338
  %v340 = vpop.f32.mrb[0].mxu0
  %341 = vmatprep.mubr.f32.mxu0 0.0
  %342 = vmatmul.mubr.f32.gmra.mrb[0].mxu0 %v270
  %v343 = vpop.f32.mrb[0].mxu0
  %v344 = vadd.f32 0.0, %v343
  %v345 = vpop.f32.mrb[0].mxu0
  %346 = vdwg.mxu0
  %v347 = vlaneseq
  %v348 = vshrl.u32 %v347, 7
  %v349 = vsub.s32 0, %v348
  %v350 = vrot.slane %v20, %v349
  %351 = vmatprep.subr.mxu0 0.0
  %352 = vmatpush1.msra.mxu0 %v339
  %353 = vmatprep.subr.mxu0 0.0
  %354 = vmatpush1.msra.mxu0 0.0
  %355 = vmatprep.subr.mxu0 0.0
  %356 = vmatpush1.msra.mxu0 0.0
  %357 = vmatprep.subr.mxu0 0.0
  %358 = vmatpush1.msra.mxu0 0.0
  %359 = vmatprep.subr.mxu0 0.0
  %360 = vmatpush1.msra.mxu0 0.0
  %361 = vmatprep.subr.mxu0 0.0
  %362 = vmatpush1.msra.mxu0 0.0
  %363 = vmatprep.subr.mxu0 0.0
  %364 = vmatpush1.msra.mxu0 0.0
  %365 = vmatprep.subr.mxu0 0.0
  %366 = vmatpush1.msra.mxu0 0.0
  %367 = vmatprep.subr.mxu0 0.0
  %368 = vmatpush1.msra.mxu0 0.0
  %369 = vmatprep.subr.mxu0 0.0
  %370 = vmatpush1.msra.mxu0 0.0
  %371 = vmatprep.subr.mxu0 0.0
  %372 = vmatpush1.msra.mxu0 0.0
  %373 = vmatprep.subr.mxu0 0.0
  %374 = vmatpush1.msra.mxu0 0.0
  %375 = vmatprep.subr.mxu0 0.0
  %376 = vmatpush1.msra.mxu0 0.0
  %377 = vmatprep.subr.mxu0 0.0
  %378 = vmatpush1.msra.mxu0 0.0
  %379 = vmatprep.subr.mxu0 0.0
  %380 = vmatpush1.msra.mxu0 0.0
  %381 = vmatprep.subr.mxu0 0.0
  %382 = vmatpush1.msra.mxu0 0.0
  %383 = vmatprep.subr.mxu0 0.0
  %384 = vmatpush1.msra.mxu0 0.0
  %385 = vmatprep.subr.mxu0 0.0
  %386 = vmatpush1.msra.mxu0 0.0
  %387 = vmatprep.subr.mxu0 0.0
  %388 = vmatpush1.msra.mxu0 0.0
  %389 = vmatprep.subr.mxu0 0.0
  %390 = vmatpush1.msra.mxu0 0.0
  %391 = vmatprep.subr.mxu0 0.0
  %392 = vmatpush1.msra.mxu0 0.0
  %393 = vmatprep.subr.mxu0 0.0
  %394 = vmatpush1.msra.mxu0 0.0
  %395 = vmatprep.subr.mxu0 0.0
  %396 = vmatpush1.msra.mxu0 0.0
  %397 = vmatprep.subr.mxu0 0.0
  %398 = vmatpush1.msra.mxu0 0.0
  %399 = vmatprep.subr.mxu0 0.0
  %400 = vmatpush1.msra.mxu0 0.0
  %401 = vmatprep.subr.mxu0 0.0
  %402 = vmatpush1.msra.mxu0 0.0
  %403 = vmatprep.subr.mxu0 0.0
  %404 = vmatpush1.msra.mxu0 0.0
  %405 = vmatprep.subr.mxu0 0.0
  %406 = vmatpush1.msra.mxu0 0.0
  %407 = vmatprep.subr.mxu0 0.0
  %408 = vmatpush1.msra.mxu0 0.0
  %409 = vmatprep.subr.mxu0 0.0
  %410 = vmatpush1.msra.mxu0 0.0
  %411 = vmatprep.subr.mxu0 0.0
  %412 = vmatpush1.msra.mxu0 0.0
  %413 = vmatprep.subr.mxu0 0.0
  %414 = vmatpush1.msra.mxu0 0.0
  %415 = vmatprep.mubr.f32.mxu0 0.0
  %416 = vmatmul.mubr.f32.gmra.mrb[0].mxu0 %v119
  %v417 = vpop.f32.mrb[0].mxu0
  %v418 = vadd.f32 %v350, %v417
  %v419 = vpop.f32.mrb[0].mxu0
  %420 = vdwg.mxu0
  %421 = vmatprep.subr.mxu0 0.0
  %422 = vmatpush1.msra.mxu0 %v344
  %423 = vmatprep.subr.mxu0 0.0
  %424 = vmatpush1.msra.mxu0 0.0
  %425 = vmatprep.subr.mxu0 0.0
  %426 = vmatpush1.msra.mxu0 0.0
  %427 = vmatprep.subr.mxu0 0.0
  %428 = vmatpush1.msra.mxu0 0.0
  %429 = vmatprep.subr.mxu0 0.0
  %430 = vmatpush1.msra.mxu0 0.0
  %431 = vmatprep.subr.mxu0 0.0
  %432 = vmatpush1.msra.mxu0 0.0
  %433 = vmatprep.subr.mxu0 0.0
  %434 = vmatpush1.msra.mxu0 0.0
  %435 = vmatprep.subr.mxu0 0.0
  %436 = vmatpush1.msra.mxu0 0.0
  %437 = vmatprep.subr.mxu0 0.0
  %438 = vmatpush1.msra.mxu0 0.0
  %439 = vmatprep.subr.mxu0 0.0
  %440 = vmatpush1.msra.mxu0 0.0
  %441 = vmatprep.subr.mxu0 0.0
  %442 = vmatpush1.msra.mxu0 0.0
  %443 = vmatprep.subr.mxu0 0.0
  %444 = vmatpush1.msra.mxu0 0.0
  %445 = vmatprep.subr.mxu0 0.0
  %446 = vmatpush1.msra.mxu0 0.0
  %447 = vmatprep.subr.mxu0 0.0
  %448 = vmatpush1.msra.mxu0 0.0
  %449 = vmatprep.subr.mxu0 0.0
  %450 = vmatpush1.msra.mxu0 0.0
  %451 = vmatprep.subr.mxu0 0.0
  %452 = vmatpush1.msra.mxu0 0.0
  %453 = vmatprep.subr.mxu0 0.0
  %454 = vmatpush1.msra.mxu0 0.0
  %455 = vmatprep.subr.mxu0 0.0
  %456 = vmatpush1.msra.mxu0 0.0
  %457 = vmatprep.subr.mxu0 0.0
  %458 = vmatpush1.msra.mxu0 0.0
  %459 = vmatprep.subr.mxu0 0.0
  %460 = vmatpush1.msra.mxu0 0.0
  %461 = vmatprep.subr.mxu0 0.0
  %462 = vmatpush1.msra.mxu0 0.0
  %463 = vmatprep.subr.mxu0 0.0
  %464 = vmatpush1.msra.mxu0 0.0
  %465 = vmatprep.subr.mxu0 0.0
  %466 = vmatpush1.msra.mxu0 0.0
  %467 = vmatprep.subr.mxu0 0.0
  %468 = vmatpush1.msra.mxu0 0.0
  %469 = vmatprep.subr.mxu0 0.0
  %470 = vmatpush1.msra.mxu0 0.0
  %471 = vmatprep.subr.mxu0 0.0
  %472 = vmatpush1.msra.mxu0 0.0
  %473 = vmatprep.subr.mxu0 0.0
  %474 = vmatpush1.msra.mxu0 0.0
  %475 = vmatprep.subr.mxu0 0.0
  %476 = vmatpush1.msra.mxu0 0.0
  %477 = vmatprep.subr.mxu0 0.0
  %478 = vmatpush1.msra.mxu0 0.0
  %479 = vmatprep.subr.mxu0 0.0
  %480 = vmatpush1.msra.mxu0 0.0
  %481 = vmatprep.subr.mxu0 0.0
  %482 = vmatpush1.msra.mxu0 0.0
  %483 = vmatprep.subr.mxu0 0.0
  %484 = vmatpush1.msra.mxu0 0.0
  %485 = vmatprep.mubr.f32.mxu0 0.0
  %486 = vmatmul.mubr.f32.gmra.mrb[0].mxu0 %v191
  %v487 = vpop.f32.mrb[0].mxu0
  %v488 = vadd.f32 %v350, %v487
  %v489 = vpop.f32.mrb[0].mxu0
  %490 = vdwg.mxu0
  %v491 = vmul.f32 %v418, 0.5
  %v492 = vmul.f32 %v488, 0.5
  %v493 = vmul.f32 %v491, 1.442695
  %v494 = vpow.pop %v493
  %v495 = vmul.f32 %v492, 1.442695
  %v496 = vpow.pop %v495
  %499 = vrot.lane.b32.xlu0 %v494, 16
  %v500 = vpop.permute.xlu0 %499
  %501 = vrot.lane.b32.xlu0 %v496, 16
  %v502 = vpop.permute.xlu0 %501
  %v505 = vmul.f32 %v11, %v500
  %v506 = vmul.f32 %v12, %v502
  %509 = vrot.lane.b32.xlu0 %v418, 24
  %v510 = vpop.permute.xlu0 %509
  %511 = vrot.lane.b32.xlu0 %v488, 24
  %v512 = vpop.permute.xlu0 %511
  %v515 = vadd.f32 %v505, %v510
  %v516 = vadd.f32 %v506, %v512
  %518 = vrot.lane.b32.xlu0 %v515, 104
  %v519 = vpop.permute.xlu0 %518
  %v520 = vsel %vm118, %v519, 0
  %522 = vmatprep.subr.mxu0 0.0
  %523 = vmatpush1.xpose.msra.mxu0 %v520
  %524 = vmatprep.subr.mxu0 0.0
  %525 = vmatpush1.xpose.msra.mxu0 0.0
  %526 = vmatprep.subr.mxu0 0.0
  %527 = vmatpush1.xpose.msra.mxu0 0.0
  %528 = vmatprep.subr.mxu0 0.0
  %529 = vmatpush1.xpose.msra.mxu0 0.0
  %530 = vmatprep.subr.mxu0 0.0
  %531 = vmatpush1.xpose.msra.mxu0 0.0
  %532 = vmatprep.subr.mxu0 0.0
  %533 = vmatpush1.xpose.msra.mxu0 0.0
  %534 = vmatprep.subr.mxu0 0.0
  %535 = vmatpush1.xpose.msra.mxu0 0.0
  %536 = vmatprep.subr.mxu0 0.0
  %537 = vmatpush1.xpose.msra.mxu0 0.0
  %538 = vmatprep.subr.mxu0 0.0
  %539 = vmatpush1.xpose.msra.mxu0 0.0
  %540 = vmatprep.subr.mxu0 0.0
  %541 = vmatpush1.xpose.msra.mxu0 0.0
  %542 = vmatprep.subr.mxu0 0.0
  %543 = vmatpush1.xpose.msra.mxu0 0.0
  %544 = vmatprep.subr.mxu0 0.0
  %545 = vmatpush1.xpose.msra.mxu0 0.0
  %546 = vmatprep.subr.mxu0 0.0
  %547 = vmatpush1.xpose.msra.mxu0 0.0
  %548 = vmatprep.subr.mxu0 0.0
  %549 = vmatpush1.xpose.msra.mxu0 0.0
  %550 = vmatprep.subr.mxu0 0.0
  %551 = vmatpush1.xpose.msra.mxu0 0.0
  %552 = vmatprep.subr.mxu0 0.0
  %553 = vmatpush1.xpose.msra.mxu0 0.0
  %554 = vmatprep.subr.mxu0 0.0
  %555 = vmatpush1.xpose.msra.mxu0 0.0
  %556 = vmatprep.subr.mxu0 0.0
  %557 = vmatpush1.xpose.msra.mxu0 0.0
  %558 = vmatprep.subr.mxu0 0.0
  %559 = vmatpush1.xpose.msra.mxu0 0.0
  %560 = vmatprep.subr.mxu0 0.0
  %561 = vmatpush1.xpose.msra.mxu0 0.0
  %562 = vmatprep.subr.mxu0 0.0
  %563 = vmatpush1.xpose.msra.mxu0 0.0
  %564 = vmatprep.subr.mxu0 0.0
  %565 = vmatpush1.xpose.msra.mxu0 0.0
  %566 = vmatprep.subr.mxu0 0.0
  %567 = vmatpush1.xpose.msra.mxu0 0.0
  %568 = vmatprep.subr.mxu0 0.0
  %569 = vmatpush1.xpose.msra.mxu0 0.0
  %570 = vmatprep.subr.mxu0 0.0
  %571 = vmatpush1.xpose.msra.mxu0 0.0
  %572 = vmatprep.subr.mxu0 0.0
  %573 = vmatpush1.xpose.msra.mxu0 0.0
  %574 = vmatprep.subr.mxu0 0.0
  %575 = vmatpush1.xpose.msra.mxu0 0.0
  %576 = vmatprep.subr.mxu0 0.0
  %577 = vmatpush1.xpose.msra.mxu0 0.0
  %578 = vmatprep.subr.mxu0 0.0
  %579 = vmatpush1.xpose.msra.mxu0 0.0
  %580 = vmatprep.subr.mxu0 0.0
  %581 = vmatpush1.xpose.msra.mxu0 0.0
  %582 = vmatprep.subr.mxu0 0.0
  %583 = vmatpush1.xpose.msra.mxu0 0.0
  %584 = vmatprep.subr.mxu0 0.0
  %585 = vmatpush1.xpose.msra.mxu0 0.0
  %586 = vmatprep.mubr.f32.mxu0 0.0
  %587 = vmatmul.mubr.f32.gmra.mrb[0].mxu0 %v520
  %v588 = vpop.f32.mrb[0].mxu0
  %v589 = vadd.f32 0.0, %v588
  %v590 = vpop.f32.mrb[0].mxu0
  %591 = vdwg.mxu0
  %593 = vrot.lane.b32.xlu0 %v516, 104
  %v594 = vpop.permute.xlu0 %593
  %v595 = vsel %vm118, %v594, 0
  %597 = vmatprep.subr.mxu0 0.0
  %598 = vmatpush1.xpose.msra.mxu0 %v595
  %599 = vmatprep.subr.mxu0 0.0
  %600 = vmatpush1.xpose.msra.mxu0 0.0
  %601 = vmatprep.subr.mxu0 0.0
  %602 = vmatpush1.xpose.msra.mxu0 0.0
  %603 = vmatprep.subr.mxu0 0.0
  %604 = vmatpush1.xpose.msra.mxu0 0.0
  %605 = vmatprep.subr.mxu0 0.0
  %606 = vmatpush1.xpose.msra.mxu0 0.0
  %607 = vmatprep.subr.mxu0 0.0
  %608 = vmatpush1.xpose.msra.mxu0 0.0
  %609 = vmatprep.subr.mxu0 0.0
  %610 = vmatpush1.xpose.msra.mxu0 0.0
  %611 = vmatprep.subr.mxu0 0.0
  %612 = vmatpush1.xpose.msra.mxu0 0.0
  %613 = vmatprep.subr.mxu0 0.0
  %614 = vmatpush1.xpose.msra.mxu0 0.0
  %615 = vmatprep.subr.mxu0 0.0
  %616 = vmatpush1.xpose.msra.mxu0 0.0
  %617 = vmatprep.subr.mxu0 0.0
  %618 = vmatpush1.xpose.msra.mxu0 0.0
  %619 = vmatprep.subr.mxu0 0.0
  %620 = vmatpush1.xpose.msra.mxu0 0.0
  %621 = vmatprep.subr.mxu0 0.0
  %622 = vmatpush1.xpose.msra.mxu0 0.0
  %623 = vmatprep.subr.mxu0 0.0
  %624 = vmatpush1.xpose.msra.mxu0 0.0
  %625 = vmatprep.subr.mxu0 0.0
  %626 = vmatpush1.xpose.msra.mxu0 0.0
  %627 = vmatprep.subr.mxu0 0.0
  %628 = vmatpush1.xpose.msra.mxu0 0.0
  %629 = vmatprep.subr.mxu0 0.0
  %630 = vmatpush1.xpose.msra.mxu0 0.0
  %631 = vmatprep.subr.mxu0 0.0
  %632 = vmatpush1.xpose.msra.mxu0 0.0
  %633 = vmatprep.subr.mxu0 0.0
  %634 = vmatpush1.xpose.msra.mxu0 0.0
  %635 = vmatprep.subr.mxu0 0.0
  %636 = vmatpush1.xpose.msra.mxu0 0.0
  %637 = vmatprep.subr.mxu0 0.0
  %638 = vmatpush1.xpose.msra.mxu0 0.0
  %639 = vmatprep.subr.mxu0 0.0
  %640 = vmatpush1.xpose.msra.mxu0 0.0
  %641 = vmatprep.subr.mxu0 0.0
  %642 = vmatpush1.xpose.msra.mxu0 0.0
  %643 = vmatprep.subr.mxu0 0.0
  %644 = vmatpush1.xpose.msra.mxu0 0.0
  %645 = vmatprep.subr.mxu0 0.0
  %646 = vmatpush1.xpose.msra.mxu0 0.0
  %647 = vmatprep.subr.mxu0 0.0
  %648 = vmatpush1.xpose.msra.mxu0 0.0
  %649 = vmatprep.subr.mxu0 0.0
  %650 = vmatpush1.xpose.msra.mxu0 0.0
  %651 = vmatprep.subr.mxu0 0.0
  %652 = vmatpush1.xpose.msra.mxu0 0.0
  %653 = vmatprep.subr.mxu0 0.0
  %654 = vmatpush1.xpose.msra.mxu0 0.0
  %655 = vmatprep.subr.mxu0 0.0
  %656 = vmatpush1.xpose.msra.mxu0 0.0
  %657 = vmatprep.subr.mxu0 0.0
  %658 = vmatpush1.xpose.msra.mxu0 0.0
  %659 = vmatprep.subr.mxu0 0.0
  %660 = vmatpush1.xpose.msra.mxu0 0.0
  %661 = vmatprep.mubr.f32.mxu0 0.0
  %662 = vmatmul.mubr.f32.gmra.mrb[0].mxu0 %v595
  %v663 = vpop.f32.mrb[0].mxu0
  %v664 = vadd.f32 0.0, %v663
  %v665 = vpop.f32.mrb[0].mxu0
  %666 = vdwg.mxu0
  %v667 = vxor.u32 %v589, 2147483648
  %v668 = vxor.u32 %v664, 2147483648
  %v669 = vmul.f32 %v667, 1.442695
  %v670 = vpow.pop %v669
  %v671 = vmul.f32 %v668, 1.442695
  %v672 = vpow.pop %v671
  %v673 = vadd.f32 %v670, 1.0
  %v674 = vadd.f32 %v672, 1.0
  %v675 = vrcp.pop %v673
  %v676 = vmul.f32 1.0, %v675
  %v677 = vrcp.pop %v674
  %v678 = vmul.f32 1.0, %v677
  %679 = vmatprep.subr.mxu0 0.0
  %680 = vmatpush1.msra.mxu0 %v21
  %681 = vmatprep.subr.mxu0 0.0
  %682 = vmatpush1.msra.mxu0 0.0
  %683 = vmatprep.subr.mxu0 0.0
  %684 = vmatpush1.msra.mxu0 0.0
  %685 = vmatprep.subr.mxu0 0.0
  %686 = vmatpush1.msra.mxu0 0.0
  %687 = vmatprep.subr.mxu0 0.0
  %688 = vmatpush1.msra.mxu0 0.0
  %689 = vmatprep.subr.mxu0 0.0
  %690 = vmatpush1.msra.mxu0 0.0
  %691 = vmatprep.subr.mxu0 0.0
  %692 = vmatpush1.msra.mxu0 0.0
  %693 = vmatprep.subr.mxu0 0.0
  %694 = vmatpush1.msra.mxu0 0.0
  %695 = vmatprep.subr.mxu0 0.0
  %696 = vmatpush1.msra.mxu0 0.0
  %697 = vmatprep.subr.mxu0 0.0
  %698 = vmatpush1.msra.mxu0 0.0
  %699 = vmatprep.subr.mxu0 0.0
  %700 = vmatpush1.msra.mxu0 0.0
  %701 = vmatprep.subr.mxu0 0.0
  %702 = vmatpush1.msra.mxu0 0.0
  %703 = vmatprep.subr.mxu0 0.0
  %704 = vmatpush1.msra.mxu0 0.0
  %705 = vmatprep.subr.mxu0 0.0
  %706 = vmatpush1.msra.mxu0 0.0
  %707 = vmatprep.subr.mxu0 0.0
  %708 = vmatpush1.msra.mxu0 0.0
  %709 = vmatprep.subr.mxu0 0.0
  %710 = vmatpush1.msra.mxu0 0.0
  %711 = vmatprep.subr.mxu0 0.0
  %712 = vmatpush1.msra.mxu0 0.0
  %713 = vmatprep.subr.mxu0 0.0
  %714 = vmatpush1.msra.mxu0 0.0
  %715 = vmatprep.subr.mxu0 0.0
  %716 = vmatpush1.msra.mxu0 0.0
  %717 = vmatprep.subr.mxu0 0.0
  %718 = vmatpush1.msra.mxu0 0.0
  %719 = vmatprep.subr.mxu0 0.0
  %720 = vmatpush1.msra.mxu0 0.0
  %721 = vmatprep.subr.mxu0 0.0
  %722 = vmatpush1.msra.mxu0 0.0
  %723 = vmatprep.subr.mxu0 0.0
  %724 = vmatpush1.msra.mxu0 0.0
  %725 = vmatprep.subr.mxu0 0.0
  %726 = vmatpush1.msra.mxu0 0.0
  %727 = vmatprep.subr.mxu0 0.0
  %728 = vmatpush1.msra.mxu0 0.0
  %729 = vmatprep.subr.mxu0 0.0
  %730 = vmatpush1.msra.mxu0 0.0
  %731 = vmatprep.subr.mxu0 0.0
  %732 = vmatpush1.msra.mxu0 0.0
  %733 = vmatprep.subr.mxu0 0.0
  %734 = vmatpush1.msra.mxu0 0.0
  %735 = vmatprep.subr.mxu0 0.0
  %736 = vmatpush1.msra.mxu0 0.0
  %737 = vmatprep.subr.mxu0 0.0
  %738 = vmatpush1.msra.mxu0 0.0
  %739 = vmatprep.subr.mxu0 0.0
  %740 = vmatpush1.msra.mxu0 0.0
  %741 = vmatprep.subr.mxu0 0.0
  %742 = vmatpush1.msra.mxu0 0.0
  %743 = vmatprep.mubr.f32.mxu0 0.0
  %744 = vmatmul.mubr.f32.gmra.mrb[0].mxu0 %v520
  %v745 = vpop.f32.mrb[0].mxu0
  %v746 = vadd.f32 0.0, %v745
  %v747 = vpop.f32.mrb[0].mxu0
  %748 = vmatprep.mubr.f32.mxu0 0.0
  %749 = vmatmul.mubr.f32.gmra.mrb[0].mxu0 %v595
  %v750 = vpop.f32.mrb[0].mxu0
  %v751 = vadd.f32 0.0, %v750
  %v752 = vpop.f32.mrb[0].mxu0
  %753 = vdwg.mxu0
  %v754 = vlaneseq
  %v755 = vshrl.u32 %v754, 7
  %v756 = vsub.s32 0, %v755
  %v757 = vrot.slane %v22, %v756
  %758 = vmatprep.subr.mxu0 0.0
  %759 = vmatpush1.msra.mxu0 %v746
  %760 = vmatprep.subr.mxu0 0.0
  %761 = vmatpush1.msra.mxu0 0.0
  %762 = vmatprep.subr.mxu0 0.0
  %763 = vmatpush1.msra.mxu0 0.0
  %764 = vmatprep.subr.mxu0 0.0
  %765 = vmatpush1.msra.mxu0 0.0
  %766 = vmatprep.subr.mxu0 0.0
  %767 = vmatpush1.msra.mxu0 0.0
  %768 = vmatprep.subr.mxu0 0.0
  %769 = vmatpush1.msra.mxu0 0.0
  %770 = vmatprep.subr.mxu0 0.0
  %771 = vmatpush1.msra.mxu0 0.0
  %772 = vmatprep.subr.mxu0 0.0
  %773 = vmatpush1.msra.mxu0 0.0
  %774 = vmatprep.subr.mxu0 0.0
  %775 = vmatpush1.msra.mxu0 0.0
  %776 = vmatprep.subr.mxu0 0.0
  %777 = vmatpush1.msra.mxu0 0.0
  %778 = vmatprep.subr.mxu0 0.0
  %779 = vmatpush1.msra.mxu0 0.0
  %780 = vmatprep.subr.mxu0 0.0
  %781 = vmatpush1.msra.mxu0 0.0
  %782 = vmatprep.subr.mxu0 0.0
  %783 = vmatpush1.msra.mxu0 0.0
  %784 = vmatprep.subr.mxu0 0.0
  %785 = vmatpush1.msra.mxu0 0.0
  %786 = vmatprep.subr.mxu0 0.0
  %787 = vmatpush1.msra.mxu0 0.0
  %788 = vmatprep.subr.mxu0 0.0
  %789 = vmatpush1.msra.mxu0 0.0
  %790 = vmatprep.subr.mxu0 0.0
  %791 = vmatpush1.msra.mxu0 0.0
  %792 = vmatprep.subr.mxu0 0.0
  %793 = vmatpush1.msra.mxu0 0.0
  %794 = vmatprep.subr.mxu0 0.0
  %795 = vmatpush1.msra.mxu0 0.0
  %796 = vmatprep.subr.mxu0 0.0
  %797 = vmatpush1.msra.mxu0 0.0
  %798 = vmatprep.subr.mxu0 0.0
  %799 = vmatpush1.msra.mxu0 0.0
  %800 = vmatprep.subr.mxu0 0.0
  %801 = vmatpush1.msra.mxu0 0.0
  %802 = vmatprep.subr.mxu0 0.0
  %803 = vmatpush1.msra.mxu0 0.0
  %804 = vmatprep.subr.mxu0 0.0
  %805 = vmatpush1.msra.mxu0 0.0
  %806 = vmatprep.subr.mxu0 0.0
  %807 = vmatpush1.msra.mxu0 0.0
  %808 = vmatprep.subr.mxu0 0.0
  %809 = vmatpush1.msra.mxu0 0.0
  %810 = vmatprep.subr.mxu0 0.0
  %811 = vmatpush1.msra.mxu0 0.0
  %812 = vmatprep.subr.mxu0 0.0
  %813 = vmatpush1.msra.mxu0 0.0
  %814 = vmatprep.subr.mxu0 0.0
  %815 = vmatpush1.msra.mxu0 0.0
  %816 = vmatprep.subr.mxu0 0.0
  %817 = vmatpush1.msra.mxu0 0.0
  %818 = vmatprep.subr.mxu0 0.0
  %819 = vmatpush1.msra.mxu0 0.0
  %820 = vmatprep.subr.mxu0 0.0
  %821 = vmatpush1.msra.mxu0 0.0
  %822 = vmatprep.mubr.f32.mxu0 0.0
  %823 = vmatmul.mubr.f32.gmra.mrb[0].mxu0 %v119
  %v824 = vpop.f32.mrb[0].mxu0
  %v825 = vadd.f32 %v757, %v824
  %v826 = vpop.f32.mrb[0].mxu0
  %827 = vdwg.mxu0
  %828 = vmatprep.subr.mxu0 0.0
  %829 = vmatpush1.msra.mxu0 %v751
  %830 = vmatprep.subr.mxu0 0.0
  %831 = vmatpush1.msra.mxu0 0.0
  %832 = vmatprep.subr.mxu0 0.0
  %833 = vmatpush1.msra.mxu0 0.0
  %834 = vmatprep.subr.mxu0 0.0
  %835 = vmatpush1.msra.mxu0 0.0
  %836 = vmatprep.subr.mxu0 0.0
  %837 = vmatpush1.msra.mxu0 0.0
  %838 = vmatprep.subr.mxu0 0.0
  %839 = vmatpush1.msra.mxu0 0.0
  %840 = vmatprep.subr.mxu0 0.0
  %841 = vmatpush1.msra.mxu0 0.0
  %842 = vmatprep.subr.mxu0 0.0
  %843 = vmatpush1.msra.mxu0 0.0
  %844 = vmatprep.subr.mxu0 0.0
  %845 = vmatpush1.msra.mxu0 0.0
  %846 = vmatprep.subr.mxu0 0.0
  %847 = vmatpush1.msra.mxu0 0.0
  %848 = vmatprep.subr.mxu0 0.0
  %849 = vmatpush1.msra.mxu0 0.0
  %850 = vmatprep.subr.mxu0 0.0
  %851 = vmatpush1.msra.mxu0 0.0
  %852 = vmatprep.subr.mxu0 0.0
  %853 = vmatpush1.msra.mxu0 0.0
  %854 = vmatprep.subr.mxu0 0.0
  %855 = vmatpush1.msra.mxu0 0.0
  %856 = vmatprep.subr.mxu0 0.0
  %857 = vmatpush1.msra.mxu0 0.0
  %858 = vmatprep.subr.mxu0 0.0
  %859 = vmatpush1.msra.mxu0 0.0
  %860 = vmatprep.subr.mxu0 0.0
  %861 = vmatpush1.msra.mxu0 0.0
  %862 = vmatprep.subr.mxu0 0.0
  %863 = vmatpush1.msra.mxu0 0.0
  %864 = vmatprep.subr.mxu0 0.0
  %865 = vmatpush1.msra.mxu0 0.0
  %866 = vmatprep.subr.mxu0 0.0
  %867 = vmatpush1.msra.mxu0 0.0
  %868 = vmatprep.subr.mxu0 0.0
  %869 = vmatpush1.msra.mxu0 0.0
  %870 = vmatprep.subr.mxu0 0.0
  %871 = vmatpush1.msra.mxu0 0.0
  %872 = vmatprep.subr.mxu0 0.0
  %873 = vmatpush1.msra.mxu0 0.0
  %874 = vmatprep.subr.mxu0 0.0
  %875 = vmatpush1.msra.mxu0 0.0
  %876 = vmatprep.subr.mxu0 0.0
  %877 = vmatpush1.msra.mxu0 0.0
  %878 = vmatprep.subr.mxu0 0.0
  %879 = vmatpush1.msra.mxu0 0.0
  %880 = vmatprep.subr.mxu0 0.0
  %881 = vmatpush1.msra.mxu0 0.0
  %882 = vmatprep.subr.mxu0 0.0
  %883 = vmatpush1.msra.mxu0 0.0
  %884 = vmatprep.subr.mxu0 0.0
  %885 = vmatpush1.msra.mxu0 0.0
  %886 = vmatprep.subr.mxu0 0.0
  %887 = vmatpush1.msra.mxu0 0.0
  %888 = vmatprep.subr.mxu0 0.0
  %889 = vmatpush1.msra.mxu0 0.0
  %890 = vmatprep.subr.mxu0 0.0
  %891 = vmatpush1.msra.mxu0 0.0
  %892 = vmatprep.mubr.f32.mxu0 0.0
  %893 = vmatmul.mubr.f32.gmra.mrb[0].mxu0 %v191
  %v894 = vpop.f32.mrb[0].mxu0
  %v895 = vadd.f32 %v757, %v894
  %v896 = vpop.f32.mrb[0].mxu0
  %897 = vdwg.mxu0
  %v898 = vmax.f32 %v825, 0.0
  %v899 = vmax.f32 %v895, 0.0
  %v901 = vsel %vm265, %v898, 0
  %v904 = vsel %vm265, %v899, 0
  %906 = vmatprep.subr.mxu0 0.0
  %907 = vmatpush1.msra.mxu0 %v23
  %908 = vmatprep.subr.mxu0 0.0
  %909 = vmatpush1.msra.mxu0 %v24
  %910 = vmatprep.subr.mxu0 0.0
  %911 = vmatpush1.msra.mxu0 %v25
  %912 = vmatprep.subr.mxu0 0.0
  %913 = vmatpush1.msra.mxu0 %v26
  %914 = vmatprep.subr.mxu0 0.0
  %915 = vmatpush1.msra.mxu0 0.0
  %916 = vmatprep.subr.mxu0 0.0
  %917 = vmatpush1.msra.mxu0 0.0
  %918 = vmatprep.subr.mxu0 0.0
  %919 = vmatpush1.msra.mxu0 0.0
  %920 = vmatprep.subr.mxu0 0.0
  %921 = vmatpush1.msra.mxu0 0.0
  %922 = vmatprep.subr.mxu0 0.0
  %923 = vmatpush1.msra.mxu0 0.0
  %924 = vmatprep.subr.mxu0 0.0
  %925 = vmatpush1.msra.mxu0 0.0
  %926 = vmatprep.subr.mxu0 0.0
  %927 = vmatpush1.msra.mxu0 0.0
  %928 = vmatprep.subr.mxu0 0.0
  %929 = vmatpush1.msra.mxu0 0.0
  %930 = vmatprep.subr.mxu0 0.0
  %931 = vmatpush1.msra.mxu0 0.0
  %932 = vmatprep.subr.mxu0 0.0
  %933 = vmatpush1.msra.mxu0 0.0
  %934 = vmatprep.subr.mxu0 0.0
  %935 = vmatpush1.msra.mxu0 0.0
  %936 = vmatprep.subr.mxu0 0.0
  %937 = vmatpush1.msra.mxu0 0.0
  %938 = vmatprep.subr.mxu0 0.0
  %939 = vmatpush1.msra.mxu0 0.0
  %940 = vmatprep.subr.mxu0 0.0
  %941 = vmatpush1.msra.mxu0 0.0
  %942 = vmatprep.subr.mxu0 0.0
  %943 = vmatpush1.msra.mxu0 0.0
  %944 = vmatprep.subr.mxu0 0.0
  %945 = vmatpush1.msra.mxu0 0.0
  %946 = vmatprep.subr.mxu0 0.0
  %947 = vmatpush1.msra.mxu0 0.0
  %948 = vmatprep.subr.mxu0 0.0
  %949 = vmatpush1.msra.mxu0 0.0
  %950 = vmatprep.subr.mxu0 0.0
  %951 = vmatpush1.msra.mxu0 0.0
  %952 = vmatprep.subr.mxu0 0.0
  %953 = vmatpush1.msra.mxu0 0.0
  %954 = vmatprep.subr.mxu0 0.0
  %955 = vmatpush1.msra.mxu0 0.0
  %956 = vmatprep.subr.mxu0 0.0
  %957 = vmatpush1.msra.mxu0 0.0
  %958 = vmatprep.subr.mxu0 0.0
  %959 = vmatpush1.msra.mxu0 0.0
  %960 = vmatprep.subr.mxu0 0.0
  %961 = vmatpush1.msra.mxu0 0.0
  %962 = vmatprep.subr.mxu0 0.0
  %963 = vmatpush1.msra.mxu0 0.0
  %964 = vmatprep.subr.mxu0 0.0
  %965 = vmatpush1.msra.mxu0 0.0
  %966 = vmatprep.subr.mxu0 0.0
  %967 = vmatpush1.msra.mxu0 0.0
  %968 = vmatprep.subr.mxu0 0.0
  %969 = vmatpush1.msra.mxu0 0.0
  %970 = vmatprep.mubr.f32.mxu0 0.0
  %971 = vmatmul.mubr.f32.gmra.mrb[0].mxu0 %v901
  %v972 = vpop.f32.mrb[0].mxu0
  %v973 = vadd.f32 0.0, %v972
  %v974 = vpop.f32.mrb[0].mxu0
  %975 = vmatprep.mubr.f32.mxu0 0.0
  %976 = vmatmul.mubr.f32.gmra.mrb[0].mxu0 %v904
  %v977 = vpop.f32.mrb[0].mxu0
  %v978 = vadd.f32 0.0, %v977
  %v979 = vpop.f32.mrb[0].mxu0
  %980 = vdwg.mxu0
  %v981 = vlaneseq
  %v982 = vshrl.u32 %v981, 7
  %v983 = vsub.s32 0, %v982
  %v984 = vrot.slane %v27, %v983
  %985 = vmatprep.subr.mxu0 0.0
  %986 = vmatpush1.msra.mxu0 %v973
  %987 = vmatprep.subr.mxu0 0.0
  %988 = vmatpush1.msra.mxu0 0.0
  %989 = vmatprep.subr.mxu0 0.0
  %990 = vmatpush1.msra.mxu0 0.0
  %991 = vmatprep.subr.mxu0 0.0
  %992 = vmatpush1.msra.mxu0 0.0
  %993 = vmatprep.subr.mxu0 0.0
  %994 = vmatpush1.msra.mxu0 0.0
  %995 = vmatprep.subr.mxu0 0.0
  %996 = vmatpush1.msra.mxu0 0.0
  %997 = vmatprep.subr.mxu0 0.0
  %998 = vmatpush1.msra.mxu0 0.0
  %999 = vmatprep.subr.mxu0 0.0
  %1000 = vmatpush1.msra.mxu0 0.0
  %1001 = vmatprep.subr.mxu0 0.0
  %1002 = vmatpush1.msra.mxu0 0.0
  %1003 = vmatprep.subr.mxu0 0.0
  %1004 = vmatpush1.msra.mxu0 0.0
  %1005 = vmatprep.subr.mxu0 0.0
  %1006 = vmatpush1.msra.mxu0 0.0
  %1007 = vmatprep.subr.mxu0 0.0
  %1008 = vmatpush1.msra.mxu0 0.0
  %1009 = vmatprep.subr.mxu0 0.0
  %1010 = vmatpush1.msra.mxu0 0.0
  %1011 = vmatprep.subr.mxu0 0.0
  %1012 = vmatpush1.msra.mxu0 0.0
  %1013 = vmatprep.subr.mxu0 0.0
  %1014 = vmatpush1.msra.mxu0 0.0
  %1015 = vmatprep.subr.mxu0 0.0
  %1016 = vmatpush1.msra.mxu0 0.0
  %1017 = vmatprep.subr.mxu0 0.0
  %1018 = vmatpush1.msra.mxu0 0.0
  %1019 = vmatprep.subr.mxu0 0.0
  %1020 = vmatpush1.msra.mxu0 0.0
  %1021 = vmatprep.subr.mxu0 0.0
  %1022 = vmatpush1.msra.mxu0 0.0
  %1023 = vmatprep.subr.mxu0 0.0
  %1024 = vmatpush1.msra.mxu0 0.0
  %1025 = vmatprep.subr.mxu0 0.0
  %1026 = vmatpush1.msra.mxu0 0.0
  %1027 = vmatprep.subr.mxu0 0.0
  %1028 = vmatpush1.msra.mxu0 0.0
  %1029 = vmatprep.subr.mxu0 0.0
  %1030 = vmatpush1.msra.mxu0 0.0
  %1031 = vmatprep.subr.mxu0 0.0
  %1032 = vmatpush1.msra.mxu0 0.0
  %1033 = vmatprep.subr.mxu0 0.0
  %1034 = vmatpush1.msra.mxu0 0.0
  %1035 = vmatprep.subr.mxu0 0.0
  %1036 = vmatpush1.msra.mxu0 0.0
  %1037 = vmatprep.subr.mxu0 0.0
  %1038 = vmatpush1.msra.mxu0 0.0
  %1039 = vmatprep.subr.mxu0 0.0
  %1040 = vmatpush1.msra.mxu0 0.0
  %1041 = vmatprep.subr.mxu0 0.0
  %1042 = vmatpush1.msra.mxu0 0.0
  %1043 = vmatprep.subr.mxu0 0.0
  %1044 = vmatpush1.msra.mxu0 0.0
  %1045 = vmatprep.subr.mxu0 0.0
  %1046 = vmatpush1.msra.mxu0 0.0
  %1047 = vmatprep.subr.mxu0 0.0
  %1048 = vmatpush1.msra.mxu0 0.0
  %1049 = vmatprep.mubr.f32.mxu0 0.0
  %1050 = vmatmul.mubr.f32.gmra.mrb[0].mxu0 %v119
  %v1051 = vpop.f32.mrb[0].mxu0
  %v1052 = vadd.f32 %v984, %v1051
  %v1053 = vpop.f32.mrb[0].mxu0
  %1054 = vdwg.mxu0
  %1055 = vmatprep.subr.mxu0 0.0
  %1056 = vmatpush1.msra.mxu0 %v978
  %1057 = vmatprep.subr.mxu0 0.0
  %1058 = vmatpush1.msra.mxu0 0.0
  %1059 = vmatprep.subr.mxu0 0.0
  %1060 = vmatpush1.msra.mxu0 0.0
  %1061 = vmatprep.subr.mxu0 0.0
  %1062 = vmatpush1.msra.mxu0 0.0
  %1063 = vmatprep.subr.mxu0 0.0
  %1064 = vmatpush1.msra.mxu0 0.0
  %1065 = vmatprep.subr.mxu0 0.0
  %1066 = vmatpush1.msra.mxu0 0.0
  %1067 = vmatprep.subr.mxu0 0.0
  %1068 = vmatpush1.msra.mxu0 0.0
  %1069 = vmatprep.subr.mxu0 0.0
  %1070 = vmatpush1.msra.mxu0 0.0
  %1071 = vmatprep.subr.mxu0 0.0
  %1072 = vmatpush1.msra.mxu0 0.0
  %1073 = vmatprep.subr.mxu0 0.0
  %1074 = vmatpush1.msra.mxu0 0.0
  %1075 = vmatprep.subr.mxu0 0.0
  %1076 = vmatpush1.msra.mxu0 0.0
  %1077 = vmatprep.subr.mxu0 0.0
  %1078 = vmatpush1.msra.mxu0 0.0
  %1079 = vmatprep.subr.mxu0 0.0
  %1080 = vmatpush1.msra.mxu0 0.0
  %1081 = vmatprep.subr.mxu0 0.0
  %1082 = vmatpush1.msra.mxu0 0.0
  %1083 = vmatprep.subr.mxu0 0.0
  %1084 = vmatpush1.msra.mxu0 0.0
  %1085 = vmatprep.subr.mxu0 0.0
  %1086 = vmatpush1.msra.mxu0 0.0
  %1087 = vmatprep.subr.mxu0 0.0
  %1088 = vmatpush1.msra.mxu0 0.0
  %1089 = vmatprep.subr.mxu0 0.0
  %1090 = vmatpush1.msra.mxu0 0.0
  %1091 = vmatprep.subr.mxu0 0.0
  %1092 = vmatpush1.msra.mxu0 0.0
  %1093 = vmatprep.subr.mxu0 0.0
  %1094 = vmatpush1.msra.mxu0 0.0
  %1095 = vmatprep.subr.mxu0 0.0
  %1096 = vmatpush1.msra.mxu0 0.0
  %1097 = vmatprep.subr.mxu0 0.0
  %1098 = vmatpush1.msra.mxu0 0.0
  %1099 = vmatprep.subr.mxu0 0.0
  %1100 = vmatpush1.msra.mxu0 0.0
  %1101 = vmatprep.subr.mxu0 0.0
  %1102 = vmatpush1.msra.mxu0 0.0
  %1103 = vmatprep.subr.mxu0 0.0
  %1104 = vmatpush1.msra.mxu0 0.0
  %1105 = vmatprep.subr.mxu0 0.0
  %1106 = vmatpush1.msra.mxu0 0.0
  %1107 = vmatprep.subr.mxu0 0.0
  %1108 = vmatpush1.msra.mxu0 0.0
  %1109 = vmatprep.subr.mxu0 0.0
  %1110 = vmatpush1.msra.mxu0 0.0
  %1111 = vmatprep.subr.mxu0 0.0
  %1112 = vmatpush1.msra.mxu0 0.0
  %1113 = vmatprep.subr.mxu0 0.0
  %1114 = vmatpush1.msra.mxu0 0.0
  %1115 = vmatprep.subr.mxu0 0.0
  %1116 = vmatpush1.msra.mxu0 0.0
  %1117 = vmatprep.subr.mxu0 0.0
  %1118 = vmatpush1.msra.mxu0 0.0
  %1119 = vmatprep.mubr.f32.mxu0 0.0
  %1120 = vmatmul.mubr.f32.gmra.mrb[0].mxu0 %v191
  %v1121 = vpop.f32.mrb[0].mxu0
  %v1122 = vadd.f32 %v984, %v1121
  %v1123 = vpop.f32.mrb[0].mxu0
  %1124 = vdwg.mxu0
  %v1125 = vxor.u32 %v1052, 2147483648
  %v1126 = vxor.u32 %v1122, 2147483648
  %v1127 = vmul.f32 %v1125, 1.442695
  %v1128 = vpow.pop %v1127
  %v1129 = vmul.f32 %v1126, 1.442695
  %v1130 = vpow.pop %v1129
  %v1131 = vadd.f32 %v1128, 1.0
  %v1132 = vadd.f32 %v1130, 1.0
  %v1133 = vrcp.pop %v1131
  %v1134 = vmul.f32 1.0, %v1133
  %v1135 = vrcp.pop %v1132
  %v1136 = vmul.f32 1.0, %v1135
  %1137 = vrot.lane.b32.xlu0 %v515, 120
  %v1138 = vpop.permute.xlu0 %1137
  %1139 = vrot.lane.b32.xlu0 %v516, 120
  %v1140 = vpop.permute.xlu0 %1139
  %1145 = vrot.lane.b32.xlu0 %v1134, 24
  %v1146 = vpop.permute.xlu0 %1145
  %1147 = vrot.lane.b32.xlu0 %v1136, 24
  %v1148 = vpop.permute.xlu0 %1147
  %1153 = vrot.lane.b32.xlu0 %v676, 40
  %v1154 = vpop.permute.xlu0 %1153
  %1155 = vrot.lane.b32.xlu0 %v678, 40
  %v1156 = vpop.permute.xlu0 %1155
  %v1159 = vsel %vm34, %v418, %v1138
  %v1160 = vsel %vm34, %v488, %v1140
  %vm1161 = vcmask 195584
  %v1162 = vsel %vm1161, %v1159, %v1146
  %v1163 = vsel %vm1161, %v1160, %v1148
  %vm1164 = vcmask 326656
  %v1165 = vsel %vm1164, %v1162, %v1154
  %v1166 = vsel %vm1164, %v1163, %v1156
  %vm1167 = vcmask 392192
  %v1168 = vsel %vm1167, %v1165, 0.0
  %v1169 = vsel %vm1167, %v1166, 0.0
  %1170 = vst [vmem:[%s2] sm:$0xff] %v1168
  %1171 = vst [vmem:[%s2 + $0x8] sm:$0xff] %v1169
  // Predicated region
  $region10: #{graphvae_forward.1} parent=0 // pred_check
    _
  $region11: #{graphvae_forward.1} parent=0 // pred_check_branch
    %1173 = sbr.rel (0) target = $region13
  $region12: #{graphvae_forward.1} parent=0 // pred_region
    _
  $region13: #{graphvae_forward.1} parent=0 // pred_fallthru
    _
  // Predicated region
  $region14: #{graphvae_forward.1} parent=0 // pred_check
    _
  $region15: #{graphvae_forward.1} parent=0 // pred_check_branch
    %1175 = sbr.rel (0) target = $region17
  $region16: #{graphvae_forward.1} parent=0 // pred_region
    _
  $region17: #{graphvae_forward.1} parent=0 // pred_fallthru
    _

</llo_original>
